<compile_context>
chip_gen: v7x
topology: tpu7x:2x2x1
jax: 0.10.0
libtpu: 0.0.40
codegen_flags: <defaults>
</compile_context>

<pallas_src>
import jax
import jax.numpy as jnp
from jax.experimental import pallas as pl
from jax.experimental.pallas import tpu as pltpu


def _logreg_kernel(x_ref, w_ref, b_ref, o_ref):
    # x_ref: (N, D) VMEM; w_ref: (1, D) VMEM (PyTorch (O, D) weight row, O == 1)
    # b_ref: (1,)  SMEM scalar;            o_ref: (N, 1) VMEM
    #
    # VPU-only: broadcast multiply against the weight row, lane-reduce over
    # the tiny feature axis, add the SMEM-scalar bias, apply sigmoid (EUP).
    b = b_ref[0]
    z = jnp.sum(x_ref[...] * w_ref[...], axis=-1, keepdims=True) + b
    o_ref[...] = jax.nn.sigmoid(z).astype(o_ref.dtype)


@jax.jit
def logistic_regression_forward(x, weight, bias):
    """sigmoid(x @ weight.T + bias), i.e. torch.sigmoid(nn.Linear(D, 1)(x)).

    x:      (N, D) float32
    weight: (1, D) float32   (PyTorch Linear layout, out_features == 1)
    bias:   (1,)   float32
    returns (N, 1) float32
    """
    n, _ = x.shape
    o = weight.shape[0]  # == 1 for this module
    return pl.pallas_call(
        _logreg_kernel,
        out_shape=jax.ShapeDtypeStruct((n, o), jnp.float32),
        in_specs=[
            pl.BlockSpec(memory_space=pltpu.MemorySpace.VMEM),   # x (full array)
            pl.BlockSpec(memory_space=pltpu.MemorySpace.VMEM),   # weight row
            pl.BlockSpec(memory_space=pltpu.MemorySpace.SMEM),   # bias scalar
        ],
        out_specs=pl.BlockSpec(memory_space=pltpu.MemorySpace.VMEM),
    )(x, weight, bias)


if __name__ == "__main__":
    input_size, output_size = 2, 1

    # Deterministic parameter init (PyTorch Linear-style uniform(-1/sqrt(in), 1/sqrt(in))).
    key = jax.random.PRNGKey(0)
    kw, kb = jax.random.split(key)
    bound = 1.0 / jnp.sqrt(jnp.float32(input_size))
    weight = jax.random.uniform(kw, (output_size, input_size),
                                jnp.float32, minval=-bound, maxval=bound)
    bias = jax.random.uniform(kb, (output_size,),
                              jnp.float32, minval=-bound, maxval=bound)

    # Inputs from the reference script.
    X = jnp.array([[100.0, -100.0],
                   [0.0, 0.0],
                   [-100.0, 100.0]], dtype=jnp.float32)

    yhat = logistic_regression_forward(X, weight, bias)
    yhat = jax.block_until_ready(yhat)

    # Cross-check against plain JAX reference.
    ref = jax.nn.sigmoid(X @ weight.T + bias)
    assert yhat.shape == (3, 1)
    assert jnp.allclose(yhat, ref, atol=1e-6), (yhat, ref)

    print("KERNEL_OK")
</pallas_src>

<mosaic_0001>
module attributes {stable_mosaic.version = 11 : i64} {
  func.func @_logreg_kernel(%arg0: memref<3x2xf32, #tpu.memory_space<vmem>>, %arg1: memref<1x2xf32, #tpu.memory_space<vmem>>, %arg2: memref<1xf32, #tpu.memory_space<smem>>, %arg3: memref<3x1xf32, #tpu.memory_space<vmem>>) attributes {dimension_semantics = [], scalar_prefetch = 0 : i64, scratch_operands = 0 : i64, tpu.core_type = #tpu.core_type<tc>} {
    %c0 = arith.constant 0 : index
    %0 = memref.load %arg2[%c0] : memref<1xf32, #tpu.memory_space<smem>>
    %c0_0 = arith.constant 0 : index
    %c0_1 = arith.constant 0 : index
    %1 = vector.load %arg0[%c0_0, %c0_1] : memref<3x2xf32, #tpu.memory_space<vmem>>, vector<3x2xf32>
    %c0_2 = arith.constant 0 : index
    %c0_3 = arith.constant 0 : index
    %2 = vector.load %arg1[%c0_2, %c0_3] : memref<1x2xf32, #tpu.memory_space<vmem>>, vector<1x2xf32>
    %3 = vector.broadcast %2 : vector<1x2xf32> to vector<3x2xf32>
    %4 = arith.mulf %1, %3 : vector<3x2xf32>
    %cst = arith.constant dense<0.000000e+00> : vector<3xf32>
    %5 = vector.multi_reduction <add>, %4, %cst [1] : vector<3x2xf32> to vector<3xf32>
    %6 = vector.shape_cast %5 : vector<3xf32> to vector<3x1xf32>
    %7 = vector.broadcast %0 : f32 to vector<3x1xf32>
    %8 = arith.addf %6, %7 : vector<3x1xf32>
    %9 = arith.negf %8 : vector<3x1xf32>
    %10 = math.exp %9 : vector<3x1xf32>
    %cst_4 = arith.constant 1.000000e+00 : f32
    %11 = vector.broadcast %cst_4 : f32 to vector<3x1xf32>
    %12 = arith.addf %11, %10 : vector<3x1xf32>
    %13 = arith.divf %11, %12 : vector<3x1xf32>
    %c0_5 = arith.constant 0 : index
    %c0_6 = arith.constant 0 : index
    %14 = vector.load %arg3[%c0_5, %c0_6] : memref<3x1xf32, #tpu.memory_space<vmem>>, vector<3x1xf32>
    tpu.vector_store %arg3[%c0_5, %c0_6], %13 {strides = array<i32>} : memref<3x1xf32, #tpu.memory_space<vmem>>, vector<3x1xf32>,
    return
  }
}

</mosaic_0001>

<llo_original>
// kernel: logistic_regression_forward.1
$region0: #{logistic_regression_forward.1}
  #allocation0 [shape = 'u32[]', space=smem, size = 0x4, offset = 0x4, fixed_abs, tag = 'smem constant byte address 0x4 - core index']
  #allocation1 [shape = 'u32[144,128]{1,0:T(1,128)}', space=vmem, size = 0x12000, scoped, tag = 'internal scratch']
  #allocation2 [shape = 'f32[1]{0:T(128)S(6)}', space=smem, size = 0x200, scoped, tag = 'scoped memory for logistic_regression_forward.1']
  %s0 = inlined_call_operand.vmem [shape: f32[3,2], index: 0, kind: input, shape index: {}]
  %s1 = inlined_call_operand.vmem [shape: f32[1,2], index: 1, kind: input, shape index: {}]
  %s2 = inlined_call_operand.<no memory space> [shape: f32[1], index: 2, kind: input, shape index: {}]
  %s3 = inlined_call_operand.vmem [shape: f32[3,1], index: 3, kind: output, shape index: {}]
  %s4 = sld [smem:[#allocation0]]
  $region22: #{logistic_regression_forward.1} parent=0
    _
  %s6 = ssub.s32 1, %s4
  %s7 = scalar_select 0, %s6, %s4
  %8 = sst [smem:[#allocation2]] %s2
  // Predicated region
  $region2: #{logistic_regression_forward.1} parent=0 // pred_check
    _
  $region3: #{logistic_regression_forward.1} parent=0 // pred_check_branch
    %10 = sbr.rel (0) target = $region5
  $region4: #{logistic_regression_forward.1} parent=0 // pred_region
    _
  $region5: #{logistic_regression_forward.1} parent=0 // pred_fallthru
    _
  // Predicated region
  $region6: #{logistic_regression_forward.1} parent=0 // pred_check
    _
  $region7: #{logistic_regression_forward.1} parent=0 // pred_check_branch
    %12 = sbr.rel (0) target = $region9
  $region8: #{logistic_regression_forward.1} parent=0 // pred_region
    _
  $region9: #{logistic_regression_forward.1} parent=0 // pred_fallthru
    _
  // Predicated region
  $region10: #{logistic_regression_forward.1} parent=0 // pred_check
    _
  $region11: #{logistic_regression_forward.1} parent=0 // pred_check_branch
    %14 = sbr.rel (0) target = $region13
  $region12: #{logistic_regression_forward.1} parent=0 // pred_region
    _
  $region13: #{logistic_regression_forward.1} parent=0 // pred_fallthru
    _
  %s15 = sld [smem:[#allocation2]]
  %v16 = vld [vmem:[%s0] sm:$0x7]
  %v17 = vld [vmem:[%s1] sm:$0x1]
  %v19 = vlaneseq
  %v20 = vshrl.u32 %v19, 7
  %v21 = vsub.s32 0, %v20
  %v22 = vrot.slane %v17, %v21
  %v24 = vmul.f32 %v16, %v22
  %vm25 = vcmask 10240
  %v26 = vsel %vm25, %v24, 0.0
  %27 = vadd.xlane.f32.xlu0 %v26
  %v28 = vpop.xlane.xlu0 %27
  %v29 = vstv %s15
  %v30 = vadd.f32 %v28, %v29
  %v31 = vxor.u32 %v30, 2147483648
  %v32 = vmul.f32 %v31, 1.442695
  %v33 = vpow.pop %v32
  %v34 = vadd.f32 %v33, 1.0
  %v35 = vrcp.pop %v34
  %v36 = vmul.f32 1.0, %v35
  %vm37 = vcmask 2048
  %38 = vst.msk [vmem:[%s3] sm:$0x7] %vm37, %v36
  // Predicated region
  $region14: #{logistic_regression_forward.1} parent=0 // pred_check
    _
  $region15: #{logistic_regression_forward.1} parent=0 // pred_check_branch
    %40 = sbr.rel (0) target = $region17
  $region16: #{logistic_regression_forward.1} parent=0 // pred_region
    _
  $region17: #{logistic_regression_forward.1} parent=0 // pred_fallthru
    _
  // Predicated region
  $region18: #{logistic_regression_forward.1} parent=0 // pred_check
    _
  $region19: #{logistic_regression_forward.1} parent=0 // pred_check_branch
    %42 = sbr.rel (0) target = $region21
  $region20: #{logistic_regression_forward.1} parent=0 // pred_region
    _
  $region21: #{logistic_regression_forward.1} parent=0 // pred_fallthru
    _

</llo_original>
